<compile_context>
chip_gen: v7x
topology: tpu7x:2x2x1
jax: 0.10.0
libtpu: 0.0.40
codegen_flags: <defaults>
</compile_context>

<pallas_src>
import functools

import jax
import jax.numpy as jnp
from jax.experimental import pallas as pl
from jax.experimental.pallas import tpu as pltpu

# ----- module hyper-parameters (matching the PyTorch defaults) -----
BACKCAST_LEN = 10        # backcast_length
FORECAST_LEN = 5         # forecast_length
UNITS = 64               # hidden width of fc1..fc4
THETAS_DIM = 4           # trend_model asserts thetas_dim <= 4
BATCH = 8

PAD = 128                # lane-padding target for hidden / output feature dims


def squeeze_last_dim(x):
    if x.ndim == 3 and x.shape[-1] == 1:
        return x[..., 0]
    return x


def _pad2d(a, rows, cols):
    """Zero-pad a 2-D array up to (rows, cols)."""
    out = jnp.zeros((rows, cols), a.dtype)
    return out.at[: a.shape[0], : a.shape[1]].set(a)


def _choose_tile_b(b):
    """Adaptive batch tile: tiny batches use one minimal tile; large batches
    use big tiles but always >=2 grid steps so v7x's 2 TensorCores both work."""
    b8 = ((b + 7) // 8) * 8          # round up to the f32 sublane tile
    if b8 < 128:
        return b8                    # tiny batch: single small tile, no row waste
    tile = min(512, ((b8 // 2) // 8) * 8)
    return max(8, tile)


def _make_kernel(use_bf16_mxu):
    mxu_dtype = jnp.bfloat16 if use_bf16_mxu else jnp.float32
    # bf16 path: default MXU precision. f32 path: explicit HIGHEST so the
    # "f32 parity" claim actually holds (no implicit truncated-bf16 pass).
    prec = None if use_bf16_mxu else jax.lax.Precision.HIGHEST

    def dot(a, w_ref):
        # Only the activation is cast per step; weights are pre-cast at prep
        # time.  Accumulation is always f32.
        return jnp.dot(a.astype(mxu_dtype), w_ref[...],
                       preferred_element_type=jnp.float32, precision=prec)

    def kernel(x_ref, w1, b1, w2, b2, w3, b3, w4, b4, wtr, out_ref):
        # fc1..fc4 : Linear + ReLU.  Bias-add / ReLU stay f32 on the VPU.
        h = jnp.maximum(dot(x_ref[...], w1) + b1[...], 0.0)
        h = jnp.maximum(dot(h, w2) + b2[...], 0.0)
        h = jnp.maximum(dot(h, w3) + b3[...], 0.0)
        h = jnp.maximum(dot(h, w4) + b4[...], 0.0)
        # theta projection + trend basis folded into one weight:
        #   (h @ wt) @ [T_back|T_fore] == h @ (wt @ [T_back|T_fore])
        # columns [0:10] = backcast, [10:15] = forecast, rest zero.
        out_ref[...] = dot(h, wtr)

    return kernel


def make_basis_matrices():
    """T_back (THETAS_DIM, BACKCAST_LEN), T_fore (THETAS_DIM, FORECAST_LEN)."""
    t_back = jnp.arange(BACKCAST_LEN, dtype=jnp.float32) / BACKCAST_LEN
    t_fore = jnp.arange(FORECAST_LEN, dtype=jnp.float32) / FORECAST_LEN
    powers = jnp.arange(THETAS_DIM, dtype=jnp.float32)[:, None]
    T_back = t_back[None, :] ** powers
    T_fore = t_fore[None, :] ** powers
    return T_back, T_fore


def prepare_operands(params, T_back, T_fore, use_bf16_mxu):
    """Pad weights/biases once; fold wt @ [T_back|T_fore]; pre-cast weights."""
    (w1, b1), (w2, b2), (w3, b3), (w4, b4), (wt,) = params
    # Fused theta-projection + trend basis (UNITS, 15), computed in f32.
    w_trend = wt @ jnp.concatenate([T_back, T_fore], axis=1)

    wdt = jnp.bfloat16 if use_bf16_mxu else jnp.float32
    weights = [
        _pad2d(w1, BACKCAST_LEN, PAD),   # K stays 10, lanes padded to 128
        _pad2d(w2, PAD, PAD),
        _pad2d(w3, PAD, PAD),
        _pad2d(w4, PAD, PAD),
        _pad2d(w_trend, PAD, PAD),
    ]
    weights = [w.astype(wdt) for w in weights]
    biases = [_pad2d(b, 1, PAD) for b in (b1, b2, b3, b4)]   # stay f32

    return [weights[0], biases[0],
            weights[1], biases[1],
            weights[2], biases[2],
            weights[3], biases[3],
            weights[4]]


@functools.partial(jax.jit, static_argnames=("use_bf16_mxu",))
def trend_block(x, params, T_back, T_fore, use_bf16_mxu=True):
    x = squeeze_last_dim(x).astype(jnp.float32)
    b, length = x.shape
    assert length == BACKCAST_LEN

    tile_b = _choose_tile_b(b)
    b_pad = ((b + tile_b - 1) // tile_b) * tile_b
    if b_pad != b:
        x = jnp.pad(x, ((0, b_pad - b), (0, 0)))   # rows only, no lane padding

    operands = prepare_operands(params, T_back, T_fore, use_bf16_mxu)

    const_map = lambda i: (0, 0)   # weights stay VMEM-resident across grid steps
    in_specs = [pl.BlockSpec((tile_b, BACKCAST_LEN), lambda i: (i, 0))]
    in_specs += [pl.BlockSpec(op.shape, const_map) for op in operands]

    out = pl.pallas_call(
        _make_kernel(use_bf16_mxu),
        out_shape=jax.ShapeDtypeStruct((b_pad, PAD), jnp.float32),
        grid=(b_pad // tile_b,),
        in_specs=in_specs,
        out_specs=pl.BlockSpec((tile_b, PAD), lambda i: (i, 0)),
        compiler_params=pltpu.CompilerParams(
            dimension_semantics=("parallel",)),
    )(x, *operands)

    # Lane-dense kernel output; cheap wrapper-side split / de-pad.
    backcast = out[:b, :BACKCAST_LEN]
    forecast = out[:b, BACKCAST_LEN:BACKCAST_LEN + FORECAST_LEN]
    return backcast, forecast


def init_params(key):
    """Mimic torch.nn.Linear default init U(-1/sqrt(fan_in), 1/sqrt(fan_in)).
    Weights stored (in, out); biases (1, out); theta projection has no bias."""
    dims = [(BACKCAST_LEN, UNITS)] + [(UNITS, UNITS)] * 3
    params = []
    for fan_in, fan_out in dims:
        key, kw, kb = jax.random.split(key, 3)
        bound = 1.0 / jnp.sqrt(jnp.float32(fan_in))
        w = jax.random.uniform(kw, (fan_in, fan_out), jnp.float32, -bound, bound)
        b = jax.random.uniform(kb, (1, fan_out), jnp.float32, -bound, bound)
        params.append((w, b))
    key, kw = jax.random.split(key)
    bound = 1.0 / jnp.sqrt(jnp.float32(UNITS))
    wt = jax.random.uniform(kw, (UNITS, THETAS_DIM), jnp.float32, -bound, bound)
    params.append((wt,))
    return params


def trend_block_ref(x, params, T_back, T_fore):
    """Pure-JAX reference mirroring the PyTorch forward (un-fused)."""
    h = squeeze_last_dim(x)
    for w, b in params[:4]:
        h = jnp.maximum(h @ w + b, 0.0)
    (wt,) = params[4]
    theta = h @ wt
    return theta @ T_back, theta @ T_fore


if __name__ == "__main__":
    key = jax.random.PRNGKey(0)
    key, kx = jax.random.split(key)
    # (batch, backcast_length, 1) exercises squeeze_last_dim.
    x = jax.random.normal(kx, (BATCH, BACKCAST_LEN, 1), jnp.float32)
    params = init_params(key)
    T_back, T_fore = make_basis_matrices()

    bc_ref, fc_ref = trend_block_ref(x, params, T_back, T_fore)

    # Default (fast) path: bf16 MXU inputs, f32 accumulation / bias / ReLU.
    backcast, forecast = trend_block(x, params, T_back, T_fore)
    jax.block_until_ready((backcast, forecast))
    assert backcast.shape == (BATCH, BACKCAST_LEN)
    assert forecast.shape == (BATCH, FORECAST_LEN)
    assert jnp.allclose(backcast, bc_ref, atol=2e-2, rtol=2e-2)
    assert jnp.allclose(forecast, fc_ref, atol=2e-2, rtol=2e-2)

    # Strict-f32 path (Precision.HIGHEST matmuls) for tight parity.
    bc32, fc32 = trend_block(x, params, T_back, T_fore, use_bf16_mxu=False)
    jax.block_until_ready((bc32, fc32))
    assert jnp.allclose(bc32, bc_ref, atol=1e-4, rtol=1e-4)
    assert jnp.allclose(fc32, fc_ref, atol=1e-4, rtol=1e-4)

    print("KERNEL_OK")
</pallas_src>

<mosaic_0001>
module attributes {stable_mosaic.version = 11 : i64} {
  func.func @kernel(%arg0: i32, %arg1: memref<8x10xf32, #tpu.memory_space<vmem>>, %arg2: memref<10x128xbf16, #tpu.memory_space<vmem>>, %arg3: memref<1x128xf32, #tpu.memory_space<vmem>>, %arg4: memref<128x128xbf16, #tpu.memory_space<vmem>>, %arg5: memref<1x128xf32, #tpu.memory_space<vmem>>, %arg6: memref<128x128xbf16, #tpu.memory_space<vmem>>, %arg7: memref<1x128xf32, #tpu.memory_space<vmem>>, %arg8: memref<128x128xbf16, #tpu.memory_space<vmem>>, %arg9: memref<1x128xf32, #tpu.memory_space<vmem>>, %arg10: memref<128x128xbf16, #tpu.memory_space<vmem>>, %arg11: memref<8x128xf32, #tpu.memory_space<vmem>>) attributes {dimension_semantics = [#tpu.dimension_semantics<parallel>], iteration_bounds = array<i64: 1>, scalar_prefetch = 0 : i64, scratch_operands = 0 : i64, tpu.core_type = #tpu.core_type<tc>, window_params = [{transform_indices = @transform_0, window_bounds = array<i64: 8, 10>}, {pipeline_mode = #tpu.pipeline_mode<synchronous>, transform_indices = @transform_1, window_bounds = array<i64: 10, 128>}, {pipeline_mode = #tpu.pipeline_mode<synchronous>, transform_indices = @transform_2, window_bounds = array<i64: 1, 128>}, {pipeline_mode = #tpu.pipeline_mode<synchronous>, transform_indices = @transform_3, window_bounds = array<i64: 128, 128>}, {pipeline_mode = #tpu.pipeline_mode<synchronous>, transform_indices = @transform_4, window_bounds = array<i64: 1, 128>}, {pipeline_mode = #tpu.pipeline_mode<synchronous>, transform_indices = @transform_5, window_bounds = array<i64: 128, 128>}, {pipeline_mode = #tpu.pipeline_mode<synchronous>, transform_indices = @transform_6, window_bounds = array<i64: 1, 128>}, {pipeline_mode = #tpu.pipeline_mode<synchronous>, transform_indices = @transform_7, window_bounds = array<i64: 128, 128>}, {pipeline_mode = #tpu.pipeline_mode<synchronous>, transform_indices = @transform_8, window_bounds = array<i64: 1, 128>}, {pipeline_mode = #tpu.pipeline_mode<synchronous>, transform_indices = @transform_9, window_bounds = array<i64: 128, 128>}, {transform_indices = @transform_10, window_bounds = array<i64: 8, 128>}]} {
    %c0 = arith.constant 0 : index
    %c0_0 = arith.constant 0 : index
    %0 = vector.load %arg1[%c0, %c0_0] : memref<8x10xf32, #tpu.memory_space<vmem>>, vector<8x10xf32>
    %1 = arith.truncf %0 : vector<8x10xf32> to vector<8x10xbf16>
    %c0_1 = arith.constant 0 : index
    %c0_2 = arith.constant 0 : index
    %2 = vector.load %arg2[%c0_1, %c0_2] : memref<10x128xbf16, #tpu.memory_space<vmem>>, vector<10x128xbf16>
    %cst = arith.constant dense<0.000000e+00> : vector<8x128xf32>
    %3 = tpu.matmul %1, %2, %cst {dimension_numbers = #tpu.dot_dimension_numbers<[1], [0], [0], [1], [0, 0, 1, 1], [], []>} : vector<8x10xbf16>, vector<10x128xbf16>, vector<8x128xf32> -> vector<8x128xf32>
    %c0_3 = arith.constant 0 : index
    %c0_4 = arith.constant 0 : index
    %4 = vector.load %arg3[%c0_3, %c0_4] : memref<1x128xf32, #tpu.memory_space<vmem>>, vector<1x128xf32>
    %5 = vector.broadcast %4 : vector<1x128xf32> to vector<8x128xf32>
    %6 = arith.addf %3, %5 : vector<8x128xf32>
    %cst_5 = arith.constant 0.000000e+00 : f32
    %7 = vector.broadcast %cst_5 : f32 to vector<8x128xf32>
    %8 = arith.maximumf %6, %7 : vector<8x128xf32>
    %9 = arith.truncf %8 : vector<8x128xf32> to vector<8x128xbf16>
    %c0_6 = arith.constant 0 : index
    %c0_7 = arith.constant 0 : index
    %10 = vector.load %arg4[%c0_6, %c0_7] : memref<128x128xbf16, #tpu.memory_space<vmem>>, vector<128x128xbf16>
    %cst_8 = arith.constant dense<0.000000e+00> : vector<8x128xf32>
    %11 = tpu.matmul %9, %10, %cst_8 {dimension_numbers = #tpu.dot_dimension_numbers<[1], [0], [0], [1], [0, 0, 1, 1], [], []>} : vector<8x128xbf16>, vector<128x128xbf16>, vector<8x128xf32> -> vector<8x128xf32>
    %c0_9 = arith.constant 0 : index
    %c0_10 = arith.constant 0 : index
    %12 = vector.load %arg5[%c0_9, %c0_10] : memref<1x128xf32, #tpu.memory_space<vmem>>, vector<1x128xf32>
    %13 = vector.broadcast %12 : vector<1x128xf32> to vector<8x128xf32>
    %14 = arith.addf %11, %13 : vector<8x128xf32>
    %cst_11 = arith.constant 0.000000e+00 : f32
    %15 = vector.broadcast %cst_11 : f32 to vector<8x128xf32>
    %16 = arith.maximumf %14, %15 : vector<8x128xf32>
    %17 = arith.truncf %16 : vector<8x128xf32> to vector<8x128xbf16>
    %c0_12 = arith.constant 0 : index
    %c0_13 = arith.constant 0 : index
    %18 = vector.load %arg6[%c0_12, %c0_13] : memref<128x128xbf16, #tpu.memory_space<vmem>>, vector<128x128xbf16>
    %cst_14 = arith.constant dense<0.000000e+00> : vector<8x128xf32>
    %19 = tpu.matmul %17, %18, %cst_14 {dimension_numbers = #tpu.dot_dimension_numbers<[1], [0], [0], [1], [0, 0, 1, 1], [], []>} : vector<8x128xbf16>, vector<128x128xbf16>, vector<8x128xf32> -> vector<8x128xf32>
    %c0_15 = arith.constant 0 : index
    %c0_16 = arith.constant 0 : index
    %20 = vector.load %arg7[%c0_15, %c0_16] : memref<1x128xf32, #tpu.memory_space<vmem>>, vector<1x128xf32>
    %21 = vector.broadcast %20 : vector<1x128xf32> to vector<8x128xf32>
    %22 = arith.addf %19, %21 : vector<8x128xf32>
    %cst_17 = arith.constant 0.000000e+00 : f32
    %23 = vector.broadcast %cst_17 : f32 to vector<8x128xf32>
    %24 = arith.maximumf %22, %23 : vector<8x128xf32>
    %25 = arith.truncf %24 : vector<8x128xf32> to vector<8x128xbf16>
    %c0_18 = arith.constant 0 : index
    %c0_19 = arith.constant 0 : index
    %26 = vector.load %arg8[%c0_18, %c0_19] : memref<128x128xbf16, #tpu.memory_space<vmem>>, vector<128x128xbf16>
    %cst_20 = arith.constant dense<0.000000e+00> : vector<8x128xf32>
    %27 = tpu.matmul %25, %26, %cst_20 {dimension_numbers = #tpu.dot_dimension_numbers<[1], [0], [0], [1], [0, 0, 1, 1], [], []>} : vector<8x128xbf16>, vector<128x128xbf16>, vector<8x128xf32> -> vector<8x128xf32>
    %c0_21 = arith.constant 0 : index
    %c0_22 = arith.constant 0 : index
    %28 = vector.load %arg9[%c0_21, %c0_22] : memref<1x128xf32, #tpu.memory_space<vmem>>, vector<1x128xf32>
    %29 = vector.broadcast %28 : vector<1x128xf32> to vector<8x128xf32>
    %30 = arith.addf %27, %29 : vector<8x128xf32>
    %cst_23 = arith.constant 0.000000e+00 : f32
    %31 = vector.broadcast %cst_23 : f32 to vector<8x128xf32>
    %32 = arith.maximumf %30, %31 : vector<8x128xf32>
    %33 = arith.truncf %32 : vector<8x128xf32> to vector<8x128xbf16>
    %c0_24 = arith.constant 0 : index
    %c0_25 = arith.constant 0 : index
    %34 = vector.load %arg10[%c0_24, %c0_25] : memref<128x128xbf16, #tpu.memory_space<vmem>>, vector<128x128xbf16>
    %cst_26 = arith.constant dense<0.000000e+00> : vector<8x128xf32>
    %35 = tpu.matmul %33, %34, %cst_26 {dimension_numbers = #tpu.dot_dimension_numbers<[1], [0], [0], [1], [0, 0, 1, 1], [], []>} : vector<8x128xbf16>, vector<128x128xbf16>, vector<8x128xf32> -> vector<8x128xf32>
    %c0_27 = arith.constant 0 : index
    %c0_28 = arith.constant 0 : index
    %36 = vector.load %arg11[%c0_27, %c0_28] : memref<8x128xf32, #tpu.memory_space<vmem>>, vector<8x128xf32>
    tpu.vector_store %arg11[%c0_27, %c0_28], %35 {strides = array<i32>} : memref<8x128xf32, #tpu.memory_space<vmem>>, vector<8x128xf32>,
    return
  }
  func.func @transform_0(%arg0: i32) -> (i32, i32) {
    %c0_i32 = arith.constant 0 : i32
    %c0_i32_0 = arith.constant 0 : i32
    return %arg0, %c0_i32 : i32, i32
  }
  func.func @transform_1(%arg0: i32) -> (i32, i32) {
    %c0_i32 = arith.constant 0 : i32
    %c0_i32_0 = arith.constant 0 : i32
    %c0_i32_1 = arith.constant 0 : i32
    return %c0_i32, %c0_i32_0 : i32, i32
  }
  func.func @transform_2(%arg0: i32) -> (i32, i32) {
    %c0_i32 = arith.constant 0 : i32
    %c0_i32_0 = arith.constant 0 : i32
    %c0_i32_1 = arith.constant 0 : i32
    return %c0_i32, %c0_i32_0 : i32, i32
  }
  func.func @transform_3(%arg0: i32) -> (i32, i32) {
    %c0_i32 = arith.constant 0 : i32
    %c0_i32_0 = arith.constant 0 : i32
    %c0_i32_1 = arith.constant 0 : i32
    return %c0_i32, %c0_i32_0 : i32, i32
  }
  func.func @transform_4(%arg0: i32) -> (i32, i32) {
    %c0_i32 = arith.constant 0 : i32
    %c0_i32_0 = arith.constant 0 : i32
    %c0_i32_1 = arith.constant 0 : i32
    return %c0_i32, %c0_i32_0 : i32, i32
  }
  func.func @transform_5(%arg0: i32) -> (i32, i32) {
    %c0_i32 = arith.constant 0 : i32
    %c0_i32_0 = arith.constant 0 : i32
    %c0_i32_1 = arith.constant 0 : i32
    return %c0_i32, %c0_i32_0 : i32, i32
  }
  func.func @transform_6(%arg0: i32) -> (i32, i32) {
    %c0_i32 = arith.constant 0 : i32
    %c0_i32_0 = arith.constant 0 : i32
    %c0_i32_1 = arith.constant 0 : i32
    return %c0_i32, %c0_i32_0 : i32, i32
  }
  func.func @transform_7(%arg0: i32) -> (i32, i32) {
    %c0_i32 = arith.constant 0 : i32
    %c0_i32_0 = arith.constant 0 : i32
    %c0_i32_1 = arith.constant 0 : i32
    return %c0_i32, %c0_i32_0 : i32, i32
  }
  func.func @transform_8(%arg0: i32) -> (i32, i32) {
    %c0_i32 = arith.constant 0 : i32
    %c0_i32_0 = arith.constant 0 : i32
    %c0_i32_1 = arith.constant 0 : i32
    return %c0_i32, %c0_i32_0 : i32, i32
  }
  func.func @transform_9(%arg0: i32) -> (i32, i32) {
    %c0_i32 = arith.constant 0 : i32
    %c0_i32_0 = arith.constant 0 : i32
    %c0_i32_1 = arith.constant 0 : i32
    return %c0_i32, %c0_i32_0 : i32, i32
  }
  func.func @transform_10(%arg0: i32) -> (i32, i32) {
    %c0_i32 = arith.constant 0 : i32
    %c0_i32_0 = arith.constant 0 : i32
    return %arg0, %c0_i32 : i32, i32
  }
}

</mosaic_0001>

<llo_original>
// kernel: trend_block.1
$region0: #{trend_block.1}
  #allocation0 [shape = 'u32[]', space=smem, size = 0x4, offset = 0x4, fixed_abs, tag = 'smem constant byte address 0x4 - core index']
  #allocation1 [shape = 'u32[144,128]{1,0:T(1,128)}', space=vmem, size = 0x12000, scoped, tag = 'internal scratch']
  %s0 = inlined_call_operand.vmem [shape: f32[8,10], index: 0, kind: input, shape index: {}]
  %s1 = inlined_call_operand.vmem [shape: bf16[10,128], index: 1, kind: input, shape index: {}]
  %s2 = inlined_call_operand.vmem [shape: f32[1,128], index: 2, kind: input, shape index: {}]
  %s3 = inlined_call_operand.vmem [shape: bf16[128,128], index: 3, kind: input, shape index: {}]
  %s4 = inlined_call_operand.vmem [shape: f32[1,128], index: 4, kind: input, shape index: {}]
  %s5 = inlined_call_operand.vmem [shape: bf16[128,128], index: 5, kind: input, shape index: {}]
  %s6 = inlined_call_operand.vmem [shape: f32[1,128], index: 6, kind: input, shape index: {}]
  %s7 = inlined_call_operand.vmem [shape: bf16[128,128], index: 7, kind: input, shape index: {}]
  %s8 = inlined_call_operand.vmem [shape: f32[1,128], index: 8, kind: input, shape index: {}]
  %s9 = inlined_call_operand.vmem [shape: bf16[128,128], index: 9, kind: input, shape index: {}]
  %s10 = inlined_call_operand.vmem [shape: f32[8,128], index: 10, kind: output, shape index: {}]
  %s11 = sld [smem:[#allocation0]]
  $region50: #{trend_block.1} parent=0
    _
  %s13 = ssub.s32 1, %s11
  %s14 = scalar_select 0, %s13, %s11
  // Predicated region
  $region2: #{trend_block.1} parent=0 // pred_check
    _
  $region3: #{trend_block.1} parent=0 // pred_check_branch
    %16 = sbr.rel (0) target = $region5
  $region4: #{trend_block.1} parent=0 // pred_region
    _
  $region5: #{trend_block.1} parent=0 // pred_fallthru
    _
  // Predicated region
  $region6: #{trend_block.1} parent=0 // pred_check
    _
  $region7: #{trend_block.1} parent=0 // pred_check_branch
    %18 = sbr.rel (0) target = $region9
  $region8: #{trend_block.1} parent=0 // pred_region
    _
  $region9: #{trend_block.1} parent=0 // pred_fallthru
    _
  // Predicated region
  $region10: #{trend_block.1} parent=0 // pred_check
    _
  $region11: #{trend_block.1} parent=0 // pred_check_branch
    %20 = sbr.rel (0) target = $region13
  $region12: #{trend_block.1} parent=0 // pred_region
    _
  $region13: #{trend_block.1} parent=0 // pred_fallthru
    _
  // Predicated region
  $region14: #{trend_block.1} parent=0 // pred_check
    _
  $region15: #{trend_block.1} parent=0 // pred_check_branch
    %22 = sbr.rel (0) target = $region17
  $region16: #{trend_block.1} parent=0 // pred_region
    _
  $region17: #{trend_block.1} parent=0 // pred_fallthru
    _
  // Predicated region
  $region18: #{trend_block.1} parent=0 // pred_check
    _
  $region19: #{trend_block.1} parent=0 // pred_check_branch
    %24 = sbr.rel (0) target = $region21
  $region20: #{trend_block.1} parent=0 // pred_region
    _
  $region21: #{trend_block.1} parent=0 // pred_fallthru
    _
  // Predicated region
  $region22: #{trend_block.1} parent=0 // pred_check
    _
  $region23: #{trend_block.1} parent=0 // pred_check_branch
    %26 = sbr.rel (0) target = $region25
  $region24: #{trend_block.1} parent=0 // pred_region
    _
  $region25: #{trend_block.1} parent=0 // pred_fallthru
    _
  // Predicated region
  $region26: #{trend_block.1} parent=0 // pred_check
    _
  $region27: #{trend_block.1} parent=0 // pred_check_branch
    %28 = sbr.rel (0) target = $region29
  $region28: #{trend_block.1} parent=0 // pred_region
    _
  $region29: #{trend_block.1} parent=0 // pred_fallthru
    _
  // Predicated region
  $region30: #{trend_block.1} parent=0 // pred_check
    _
  $region31: #{trend_block.1} parent=0 // pred_check_branch
    %30 = sbr.rel (0) target = $region33
  $region32: #{trend_block.1} parent=0 // pred_region
    _
  $region33: #{trend_block.1} parent=0 // pred_fallthru
    _
  // Predicated region
  $region34: #{trend_block.1} parent=0 // pred_check
    _
  $region35: #{trend_block.1} parent=0 // pred_check_branch
    %32 = sbr.rel (0) target = $region37
  $region36: #{trend_block.1} parent=0 // pred_region
    _
  $region37: #{trend_block.1} parent=0 // pred_fallthru
    _
  // Predicated region
  $region38: #{trend_block.1} parent=0 // pred_check
    _
  $region39: #{trend_block.1} parent=0 // pred_check_branch
    %34 = sbr.rel (0) target = $region41
  $region40: #{trend_block.1} parent=0 // pred_region
    _
  $region41: #{trend_block.1} parent=0 // pred_fallthru
    _
  %v36 = vld [vmem:[%s0] sm:$0xff]
  %v37 = vpack.c.bf16 %v36, %v36
  %v38 = vld [vmem:[%s1] sm:$0xf]
  %v39 = vld [vmem:[%s1 + $0x4] sm:$0x1]
  %v40 = vld [vmem:[%s2] sm:$0x1]
  %v42 = vlaneseq
  %v43 = vshrl.u32 %v42, 7
  %v44 = vsub.s32 0, %v43
  %v45 = vrot.slane %v40, %v44
  %v49 = vunpack.c.l.b16 %v38
  %v50 = vunpack.c.l.b16 %v39
  %v51 = vpack.c.b16 %v50, %v49
  %vm52 = vcmask 80896
  %v54 = vsel %vm52, %v37, 0
  %vm56 = vcmask 1044480
  %v58 = vsel %vm56, %v51, 0
  %60 = vmatprep.subr.bf16.mxu0 0
  %61 = vmatpush1.bf16.msra.mxu0 %v58
  %62 = vmatprep.subr.bf16.mxu0 0
  %63 = vmatpush1.bf16.msra.mxu0 0
  %64 = vmatprep.subr.bf16.mxu0 0
  %65 = vmatpush1.bf16.msra.mxu0 0
  %66 = vmatprep.subr.bf16.mxu0 0
  %67 = vmatpush1.bf16.msra.mxu0 0
  %68 = vmatprep.subr.bf16.mxu0 0
  %69 = vmatpush1.bf16.msra.mxu0 0
  %70 = vmatprep.subr.bf16.mxu0 0
  %71 = vmatpush1.bf16.msra.mxu0 0
  %72 = vmatprep.subr.bf16.mxu0 0
  %73 = vmatpush1.bf16.msra.mxu0 0
  %74 = vmatprep.subr.bf16.mxu0 0
  %75 = vmatpush1.bf16.msra.mxu0 0
  %76 = vmatprep.subr.bf16.mxu0 0
  %77 = vmatpush1.bf16.msra.mxu0 0
  %78 = vmatprep.subr.bf16.mxu0 0
  %79 = vmatpush1.bf16.msra.mxu0 0
  %80 = vmatprep.subr.bf16.mxu0 0
  %81 = vmatpush1.bf16.msra.mxu0 0
  %82 = vmatprep.subr.bf16.mxu0 0
  %83 = vmatpush1.bf16.msra.mxu0 0
  %84 = vmatprep.subr.bf16.mxu0 0
  %85 = vmatpush1.bf16.msra.mxu0 0
  %86 = vmatprep.subr.bf16.mxu0 0
  %87 = vmatpush1.bf16.msra.mxu0 0
  %88 = vmatprep.subr.bf16.mxu0 0
  %89 = vmatpush1.bf16.msra.mxu0 0
  %90 = vmatprep.subr.bf16.mxu0 0
  %91 = vmatpush1.bf16.msra.mxu0 0
  %92 = vmatprep.mubr.bf16.mxu0 0
  %93 = vmatmul.mubr.bf16.gmra.mrb[0].mxu0 %v54
  %v94 = vpop.f32.mrb[0].mxu0
  %v95 = vadd.f32 %v45, %v94
  %v96 = vpop.f32.mrb[0].mxu0
  %v97 = vpop.f32.mrb[0].mxu0
  %v98 = vpop.f32.mrb[0].mxu0
  %99 = vdwg.mxu0
  %v100 = vmax.f32 %v95, 0.0
  %v101 = vpack.c.bf16 %v100, %v100
  %v102 = vld [vmem:[%s3] sm:$0xf]
  %v103 = vld [vmem:[%s3 + $0x4] sm:$0xf]
  %v104 = vld [vmem:[%s3 + $0x8] sm:$0xf]
  %v105 = vld [vmem:[%s3 + $0xc] sm:$0xf]
  %v106 = vld [vmem:[%s3 + $0x10] sm:$0xf]
  %v107 = vld [vmem:[%s3 + $0x14] sm:$0xf]
  %v108 = vld [vmem:[%s3 + $0x18] sm:$0xf]
  %v109 = vld [vmem:[%s3 + $0x1c] sm:$0xf]
  %v110 = vld [vmem:[%s3 + $0x20] sm:$0xf]
  %v111 = vld [vmem:[%s3 + $0x24] sm:$0xf]
  %v112 = vld [vmem:[%s3 + $0x28] sm:$0xf]
  %v113 = vld [vmem:[%s3 + $0x2c] sm:$0xf]
  %v114 = vld [vmem:[%s3 + $0x30] sm:$0xf]
  %v115 = vld [vmem:[%s3 + $0x34] sm:$0xf]
  %v116 = vld [vmem:[%s3 + $0x38] sm:$0xf]
  %v117 = vld [vmem:[%s3 + $0x3c] sm:$0xf]
  %v118 = vld [vmem:[%s4] sm:$0x1]
  %v120 = vlaneseq
  %v121 = vshrl.u32 %v120, 7
  %v122 = vsub.s32 0, %v121
  %v123 = vrot.slane %v118, %v122
  %v141 = vunpack.c.l.b16 %v102
  %v142 = vunpack.c.l.b16 %v103
  %v143 = vunpack.c.l.b16 %v104
  %v144 = vunpack.c.l.b16 %v105
  %v145 = vunpack.c.l.b16 %v106
  %v146 = vunpack.c.l.b16 %v107
  %v147 = vunpack.c.l.b16 %v108
  %v148 = vunpack.c.l.b16 %v109
  %v149 = vunpack.c.l.b16 %v110
  %v150 = vunpack.c.l.b16 %v111
  %v151 = vunpack.c.l.b16 %v112
  %v152 = vunpack.c.l.b16 %v113
  %v153 = vunpack.c.l.b16 %v114
  %v154 = vunpack.c.l.b16 %v115
  %v155 = vunpack.c.l.b16 %v116
  %v156 = vunpack.c.l.b16 %v117
  %v157 = vpack.c.b16 %v142, %v141
  %v158 = vpack.c.b16 %v144, %v143
  %v159 = vpack.c.b16 %v146, %v145
  %v160 = vpack.c.b16 %v148, %v147
  %v161 = vpack.c.b16 %v150, %v149
  %v162 = vpack.c.b16 %v152, %v151
  %v163 = vpack.c.b16 %v154, %v153
  %v164 = vpack.c.b16 %v156, %v155
  %173 = vmatprep.subr.bf16.mxu0 0
  %174 = vmatpush1.bf16.msra.mxu0 %v157
  %175 = vmatprep.subr.bf16.mxu0 0
  %176 = vmatpush1.bf16.msra.mxu0 %v158
  %177 = vmatprep.subr.bf16.mxu0 0
  %178 = vmatpush1.bf16.msra.mxu0 %v159
  %179 = vmatprep.subr.bf16.mxu0 0
  %180 = vmatpush1.bf16.msra.mxu0 %v160
  %181 = vmatprep.subr.bf16.mxu0 0
  %182 = vmatpush1.bf16.msra.mxu0 %v161
  %183 = vmatprep.subr.bf16.mxu0 0
  %184 = vmatpush1.bf16.msra.mxu0 %v162
  %185 = vmatprep.subr.bf16.mxu0 0
  %186 = vmatpush1.bf16.msra.mxu0 %v163
  %187 = vmatprep.subr.bf16.mxu0 0
  %188 = vmatpush1.bf16.msra.mxu0 %v164
  %189 = vmatprep.subr.bf16.mxu0 0
  %190 = vmatpush1.bf16.msra.mxu0 0
  %191 = vmatprep.subr.bf16.mxu0 0
  %192 = vmatpush1.bf16.msra.mxu0 0
  %193 = vmatprep.subr.bf16.mxu0 0
  %194 = vmatpush1.bf16.msra.mxu0 0
  %195 = vmatprep.subr.bf16.mxu0 0
  %196 = vmatpush1.bf16.msra.mxu0 0
  %197 = vmatprep.subr.bf16.mxu0 0
  %198 = vmatpush1.bf16.msra.mxu0 0
  %199 = vmatprep.subr.bf16.mxu0 0
  %200 = vmatpush1.bf16.msra.mxu0 0
  %201 = vmatprep.subr.bf16.mxu0 0
  %202 = vmatpush1.bf16.msra.mxu0 0
  %203 = vmatprep.subr.bf16.mxu0 0
  %204 = vmatpush1.bf16.msra.mxu0 0
  %205 = vmatprep.mubr.bf16.mxu0 0
  %206 = vmatmul.mubr.bf16.gmra.mrb[0].mxu0 %v101
  %v207 = vpop.f32.mrb[0].mxu0
  %v208 = vadd.f32 %v123, %v207
  %v209 = vpop.f32.mrb[0].mxu0
  %v210 = vpop.f32.mrb[0].mxu0
  %v211 = vpop.f32.mrb[0].mxu0
  %212 = vdwg.mxu0
  %v213 = vmax.f32 %v208, 0.0
  %v214 = vpack.c.bf16 %v213, %v213
  %v215 = vld [vmem:[%s5] sm:$0xf]
  %v216 = vld [vmem:[%s5 + $0x4] sm:$0xf]
  %v217 = vld [vmem:[%s5 + $0x8] sm:$0xf]
  %v218 = vld [vmem:[%s5 + $0xc] sm:$0xf]
  %v219 = vld [vmem:[%s5 + $0x10] sm:$0xf]
  %v220 = vld [vmem:[%s5 + $0x14] sm:$0xf]
  %v221 = vld [vmem:[%s5 + $0x18] sm:$0xf]
  %v222 = vld [vmem:[%s5 + $0x1c] sm:$0xf]
  %v223 = vld [vmem:[%s5 + $0x20] sm:$0xf]
  %v224 = vld [vmem:[%s5 + $0x24] sm:$0xf]
  %v225 = vld [vmem:[%s5 + $0x28] sm:$0xf]
  %v226 = vld [vmem:[%s5 + $0x2c] sm:$0xf]
  %v227 = vld [vmem:[%s5 + $0x30] sm:$0xf]
  %v228 = vld [vmem:[%s5 + $0x34] sm:$0xf]
  %v229 = vld [vmem:[%s5 + $0x38] sm:$0xf]
  %v230 = vld [vmem:[%s5 + $0x3c] sm:$0xf]
  %v231 = vld [vmem:[%s6] sm:$0x1]
  %v233 = vlaneseq
  %v234 = vshrl.u32 %v233, 7
  %v235 = vsub.s32 0, %v234
  %v236 = vrot.slane %v231, %v235
  %v254 = vunpack.c.l.b16 %v215
  %v255 = vunpack.c.l.b16 %v216
  %v256 = vunpack.c.l.b16 %v217
  %v257 = vunpack.c.l.b16 %v218
  %v258 = vunpack.c.l.b16 %v219
  %v259 = vunpack.c.l.b16 %v220
  %v260 = vunpack.c.l.b16 %v221
  %v261 = vunpack.c.l.b16 %v222
  %v262 = vunpack.c.l.b16 %v223
  %v263 = vunpack.c.l.b16 %v224
  %v264 = vunpack.c.l.b16 %v225
  %v265 = vunpack.c.l.b16 %v226
  %v266 = vunpack.c.l.b16 %v227
  %v267 = vunpack.c.l.b16 %v228
  %v268 = vunpack.c.l.b16 %v229
  %v269 = vunpack.c.l.b16 %v230
  %v270 = vpack.c.b16 %v255, %v254
  %v271 = vpack.c.b16 %v257, %v256
  %v272 = vpack.c.b16 %v259, %v258
  %v273 = vpack.c.b16 %v261, %v260
  %v274 = vpack.c.b16 %v263, %v262
  %v275 = vpack.c.b16 %v265, %v264
  %v276 = vpack.c.b16 %v267, %v266
  %v277 = vpack.c.b16 %v269, %v268
  %286 = vmatprep.subr.bf16.mxu0 0
  %287 = vmatpush1.bf16.msra.mxu0 %v270
  %288 = vmatprep.subr.bf16.mxu0 0
  %289 = vmatpush1.bf16.msra.mxu0 %v271
  %290 = vmatprep.subr.bf16.mxu0 0
  %291 = vmatpush1.bf16.msra.mxu0 %v272
  %292 = vmatprep.subr.bf16.mxu0 0
  %293 = vmatpush1.bf16.msra.mxu0 %v273
  %294 = vmatprep.subr.bf16.mxu0 0
  %295 = vmatpush1.bf16.msra.mxu0 %v274
  %296 = vmatprep.subr.bf16.mxu0 0
  %297 = vmatpush1.bf16.msra.mxu0 %v275
  %298 = vmatprep.subr.bf16.mxu0 0
  %299 = vmatpush1.bf16.msra.mxu0 %v276
  %300 = vmatprep.subr.bf16.mxu0 0
  %301 = vmatpush1.bf16.msra.mxu0 %v277
  %302 = vmatprep.subr.bf16.mxu0 0
  %303 = vmatpush1.bf16.msra.mxu0 0
  %304 = vmatprep.subr.bf16.mxu0 0
  %305 = vmatpush1.bf16.msra.mxu0 0
  %306 = vmatprep.subr.bf16.mxu0 0
  %307 = vmatpush1.bf16.msra.mxu0 0
  %308 = vmatprep.subr.bf16.mxu0 0
  %309 = vmatpush1.bf16.msra.mxu0 0
  %310 = vmatprep.subr.bf16.mxu0 0
  %311 = vmatpush1.bf16.msra.mxu0 0
  %312 = vmatprep.subr.bf16.mxu0 0
  %313 = vmatpush1.bf16.msra.mxu0 0
  %314 = vmatprep.subr.bf16.mxu0 0
  %315 = vmatpush1.bf16.msra.mxu0 0
  %316 = vmatprep.subr.bf16.mxu0 0
  %317 = vmatpush1.bf16.msra.mxu0 0
  %318 = vmatprep.mubr.bf16.mxu0 0
  %319 = vmatmul.mubr.bf16.gmra.mrb[0].mxu0 %v214
  %v320 = vpop.f32.mrb[0].mxu0
  %v321 = vadd.f32 %v236, %v320
  %v322 = vpop.f32.mrb[0].mxu0
  %v323 = vpop.f32.mrb[0].mxu0
  %v324 = vpop.f32.mrb[0].mxu0
  %325 = vdwg.mxu0
  %v326 = vmax.f32 %v321, 0.0
  %v327 = vpack.c.bf16 %v326, %v326
  %v328 = vld [vmem:[%s7] sm:$0xf]
  %v329 = vld [vmem:[%s7 + $0x4] sm:$0xf]
  %v330 = vld [vmem:[%s7 + $0x8] sm:$0xf]
  %v331 = vld [vmem:[%s7 + $0xc] sm:$0xf]
  %v332 = vld [vmem:[%s7 + $0x10] sm:$0xf]
  %v333 = vld [vmem:[%s7 + $0x14] sm:$0xf]
  %v334 = vld [vmem:[%s7 + $0x18] sm:$0xf]
  %v335 = vld [vmem:[%s7 + $0x1c] sm:$0xf]
  %v336 = vld [vmem:[%s7 + $0x20] sm:$0xf]
  %v337 = vld [vmem:[%s7 + $0x24] sm:$0xf]
  %v338 = vld [vmem:[%s7 + $0x28] sm:$0xf]
  %v339 = vld [vmem:[%s7 + $0x2c] sm:$0xf]
  %v340 = vld [vmem:[%s7 + $0x30] sm:$0xf]
  %v341 = vld [vmem:[%s7 + $0x34] sm:$0xf]
  %v342 = vld [vmem:[%s7 + $0x38] sm:$0xf]
  %v343 = vld [vmem:[%s7 + $0x3c] sm:$0xf]
  %v344 = vld [vmem:[%s8] sm:$0x1]
  %v346 = vlaneseq
  %v347 = vshrl.u32 %v346, 7
  %v348 = vsub.s32 0, %v347
  %v349 = vrot.slane %v344, %v348
  %v367 = vunpack.c.l.b16 %v328
  %v368 = vunpack.c.l.b16 %v329
  %v369 = vunpack.c.l.b16 %v330
  %v370 = vunpack.c.l.b16 %v331
  %v371 = vunpack.c.l.b16 %v332
  %v372 = vunpack.c.l.b16 %v333
  %v373 = vunpack.c.l.b16 %v334
  %v374 = vunpack.c.l.b16 %v335
  %v375 = vunpack.c.l.b16 %v336
  %v376 = vunpack.c.l.b16 %v337
  %v377 = vunpack.c.l.b16 %v338
  %v378 = vunpack.c.l.b16 %v339
  %v379 = vunpack.c.l.b16 %v340
  %v380 = vunpack.c.l.b16 %v341
  %v381 = vunpack.c.l.b16 %v342
  %v382 = vunpack.c.l.b16 %v343
  %v383 = vpack.c.b16 %v368, %v367
  %v384 = vpack.c.b16 %v370, %v369
  %v385 = vpack.c.b16 %v372, %v371
  %v386 = vpack.c.b16 %v374, %v373
  %v387 = vpack.c.b16 %v376, %v375
  %v388 = vpack.c.b16 %v378, %v377
  %v389 = vpack.c.b16 %v380, %v379
  %v390 = vpack.c.b16 %v382, %v381
  %399 = vmatprep.subr.bf16.mxu0 0
  %400 = vmatpush1.bf16.msra.mxu0 %v383
  %401 = vmatprep.subr.bf16.mxu0 0
  %402 = vmatpush1.bf16.msra.mxu0 %v384
  %403 = vmatprep.subr.bf16.mxu0 0
  %404 = vmatpush1.bf16.msra.mxu0 %v385
  %405 = vmatprep.subr.bf16.mxu0 0
  %406 = vmatpush1.bf16.msra.mxu0 %v386
  %407 = vmatprep.subr.bf16.mxu0 0
  %408 = vmatpush1.bf16.msra.mxu0 %v387
  %409 = vmatprep.subr.bf16.mxu0 0
  %410 = vmatpush1.bf16.msra.mxu0 %v388
  %411 = vmatprep.subr.bf16.mxu0 0
  %412 = vmatpush1.bf16.msra.mxu0 %v389
  %413 = vmatprep.subr.bf16.mxu0 0
  %414 = vmatpush1.bf16.msra.mxu0 %v390
  %415 = vmatprep.subr.bf16.mxu0 0
  %416 = vmatpush1.bf16.msra.mxu0 0
  %417 = vmatprep.subr.bf16.mxu0 0
  %418 = vmatpush1.bf16.msra.mxu0 0
  %419 = vmatprep.subr.bf16.mxu0 0
  %420 = vmatpush1.bf16.msra.mxu0 0
  %421 = vmatprep.subr.bf16.mxu0 0
  %422 = vmatpush1.bf16.msra.mxu0 0
  %423 = vmatprep.subr.bf16.mxu0 0
  %424 = vmatpush1.bf16.msra.mxu0 0
  %425 = vmatprep.subr.bf16.mxu0 0
  %426 = vmatpush1.bf16.msra.mxu0 0
  %427 = vmatprep.subr.bf16.mxu0 0
  %428 = vmatpush1.bf16.msra.mxu0 0
  %429 = vmatprep.subr.bf16.mxu0 0
  %430 = vmatpush1.bf16.msra.mxu0 0
  %431 = vmatprep.mubr.bf16.mxu0 0
  %432 = vmatmul.mubr.bf16.gmra.mrb[0].mxu0 %v327
  %v433 = vpop.f32.mrb[0].mxu0
  %v434 = vadd.f32 %v349, %v433
  %v435 = vpop.f32.mrb[0].mxu0
  %v436 = vpop.f32.mrb[0].mxu0
  %v437 = vpop.f32.mrb[0].mxu0
  %438 = vdwg.mxu0
  %v439 = vmax.f32 %v434, 0.0
  %v440 = vpack.c.bf16 %v439, %v439
  %v441 = vld [vmem:[%s9] sm:$0xf]
  %v442 = vld [vmem:[%s9 + $0x4] sm:$0xf]
  %v443 = vld [vmem:[%s9 + $0x8] sm:$0xf]
  %v444 = vld [vmem:[%s9 + $0xc] sm:$0xf]
  %v445 = vld [vmem:[%s9 + $0x10] sm:$0xf]
  %v446 = vld [vmem:[%s9 + $0x14] sm:$0xf]
  %v447 = vld [vmem:[%s9 + $0x18] sm:$0xf]
  %v448 = vld [vmem:[%s9 + $0x1c] sm:$0xf]
  %v449 = vld [vmem:[%s9 + $0x20] sm:$0xf]
  %v450 = vld [vmem:[%s9 + $0x24] sm:$0xf]
  %v451 = vld [vmem:[%s9 + $0x28] sm:$0xf]
  %v452 = vld [vmem:[%s9 + $0x2c] sm:$0xf]
  %v453 = vld [vmem:[%s9 + $0x30] sm:$0xf]
  %v454 = vld [vmem:[%s9 + $0x34] sm:$0xf]
  %v455 = vld [vmem:[%s9 + $0x38] sm:$0xf]
  %v456 = vld [vmem:[%s9 + $0x3c] sm:$0xf]
  %v473 = vunpack.c.l.b16 %v441
  %v474 = vunpack.c.l.b16 %v442
  %v475 = vunpack.c.l.b16 %v443
  %v476 = vunpack.c.l.b16 %v444
  %v477 = vunpack.c.l.b16 %v445
  %v478 = vunpack.c.l.b16 %v446
  %v479 = vunpack.c.l.b16 %v447
  %v480 = vunpack.c.l.b16 %v448
  %v481 = vunpack.c.l.b16 %v449
  %v482 = vunpack.c.l.b16 %v450
  %v483 = vunpack.c.l.b16 %v451
  %v484 = vunpack.c.l.b16 %v452
  %v485 = vunpack.c.l.b16 %v453
  %v486 = vunpack.c.l.b16 %v454
  %v487 = vunpack.c.l.b16 %v455
  %v488 = vunpack.c.l.b16 %v456
  %v489 = vpack.c.b16 %v474, %v473
  %v490 = vpack.c.b16 %v476, %v475
  %v491 = vpack.c.b16 %v478, %v477
  %v492 = vpack.c.b16 %v480, %v479
  %v493 = vpack.c.b16 %v482, %v481
  %v494 = vpack.c.b16 %v484, %v483
  %v495 = vpack.c.b16 %v486, %v485
  %v496 = vpack.c.b16 %v488, %v487
  %505 = vmatprep.subr.bf16.mxu0 0
  %506 = vmatpush1.bf16.msra.mxu0 %v489
  %507 = vmatprep.subr.bf16.mxu0 0
  %508 = vmatpush1.bf16.msra.mxu0 %v490
  %509 = vmatprep.subr.bf16.mxu0 0
  %510 = vmatpush1.bf16.msra.mxu0 %v491
  %511 = vmatprep.subr.bf16.mxu0 0
  %512 = vmatpush1.bf16.msra.mxu0 %v492
  %513 = vmatprep.subr.bf16.mxu0 0
  %514 = vmatpush1.bf16.msra.mxu0 %v493
  %515 = vmatprep.subr.bf16.mxu0 0
  %516 = vmatpush1.bf16.msra.mxu0 %v494
  %517 = vmatprep.subr.bf16.mxu0 0
  %518 = vmatpush1.bf16.msra.mxu0 %v495
  %519 = vmatprep.subr.bf16.mxu0 0
  %520 = vmatpush1.bf16.msra.mxu0 %v496
  %521 = vmatprep.subr.bf16.mxu0 0
  %522 = vmatpush1.bf16.msra.mxu0 0
  %523 = vmatprep.subr.bf16.mxu0 0
  %524 = vmatpush1.bf16.msra.mxu0 0
  %525 = vmatprep.subr.bf16.mxu0 0
  %526 = vmatpush1.bf16.msra.mxu0 0
  %527 = vmatprep.subr.bf16.mxu0 0
  %528 = vmatpush1.bf16.msra.mxu0 0
  %529 = vmatprep.subr.bf16.mxu0 0
  %530 = vmatpush1.bf16.msra.mxu0 0
  %531 = vmatprep.subr.bf16.mxu0 0
  %532 = vmatpush1.bf16.msra.mxu0 0
  %533 = vmatprep.subr.bf16.mxu0 0
  %534 = vmatpush1.bf16.msra.mxu0 0
  %535 = vmatprep.subr.bf16.mxu0 0
  %536 = vmatpush1.bf16.msra.mxu0 0
  %537 = vmatprep.mubr.bf16.mxu0 0
  %538 = vmatmul.mubr.bf16.gmra.mrb[0].mxu0 %v440
  %v539 = vpop.f32.mrb[0].mxu0
  %v540 = vadd.f32 0.0, %v539
  %v541 = vpop.f32.mrb[0].mxu0
  %v542 = vpop.f32.mrb[0].mxu0
  %v543 = vpop.f32.mrb[0].mxu0
  %544 = vdwg.mxu0
  %545 = vst [vmem:[%s10] sm:$0xff] %v540
  // Predicated region
  $region42: #{trend_block.1} parent=0 // pred_check
    _
  $region43: #{trend_block.1} parent=0 // pred_check_branch
    %547 = sbr.rel (0) target = $region45
  $region44: #{trend_block.1} parent=0 // pred_region
    _
  $region45: #{trend_block.1} parent=0 // pred_fallthru
    _
  // Predicated region
  $region46: #{trend_block.1} parent=0 // pred_check
    _
  $region47: #{trend_block.1} parent=0 // pred_check_branch
    %549 = sbr.rel (0) target = $region49
  $region48: #{trend_block.1} parent=0 // pred_region
    _
  $region49: #{trend_block.1} parent=0 // pred_fallthru
    _

</llo_original>
